<compile_context>
chip_gen: v7x
topology: tpu7x:2x2x1
jax: 0.10.0
libtpu: 0.0.40
codegen_flags: <defaults>
</compile_context>

<pallas_src>
import functools

import jax
import jax.numpy as jnp
from jax.experimental import pallas as pl
from jax.experimental.pallas import tpu as pltpu


def _rnn_seq_kernel(x_ref, h0_ref, wx_ref, wh_ref, b_ref, out_ref, *,
                    seq_len, batch, hidden_size, output_size):
    """Single invocation = the whole sequence.

    x_ref:  (T*B, I)    all timestep inputs, flattened over time
    h0_ref: (B, Hp)     initial hidden, padded to Hp lanes (cols [0:H) real, rest zero)
    wx_ref: (I, Hp)     fused [i2h | i2o] weight (input rows), padded to Hp columns
    wh_ref: (Hp, Hp)    fused weight lifted to the padded state: rows [0:H) real, rest zero
    b_ref:  (1, Hp)     fused bias, padded
    out_ref:(T*B, Hp)   per-step rows: [:, :H) = new hidden, [:, H:H+O) = log-softmax
    """
    B, H, O = batch, hidden_size, output_size
    Hp = out_ref.shape[-1]

    # ---- Prologue: hoisted input projection for ALL timesteps (one big MXU matmul). ----
    xwx = (jnp.dot(x_ref[...], wx_ref[...], preferred_element_type=jnp.float32)
           + b_ref[...])                                         # (T*B, Hp), bias folded in

    wh = wh_ref[...]                                             # (Hp, Hp), rows >= H are 0

    # Loop-invariant lane mask over the full 128-wide fused row (hoisted, built once).
    col = jax.lax.broadcasted_iota(jnp.int32, (B, Hp), 1)
    is_logit = jnp.logical_and(col >= H, col < H + O)            # real output lanes only
    neg_inf = jnp.full((B, Hp), -jnp.inf, jnp.float32)
    zeros = jnp.zeros((B, Hp), jnp.float32)

    # ---- Serial recurrence: fully unrolled (T is small) with static slice starts. ----
    h = h0_ref[...]                                              # (B, Hp) padded carry
    for t in range(seq_len):
        fused = (xwx[t * B:(t + 1) * B, :]
                 + jnp.dot(h, wh, preferred_element_type=jnp.float32))   # (B, Hp)

        # Masked, numerically stable log-softmax over the logit lanes only.
        masked = jnp.where(is_logit, fused, neg_inf)
        m = jnp.max(masked, axis=1, keepdims=True)
        lse = jnp.log(jnp.sum(jnp.exp(masked - m), axis=1, keepdims=True))

        # Single full-width (lane-dense) store: hidden lanes unchanged, logit lanes -> logp.
        out_ref[t * B:(t + 1) * B, :] = fused - jnp.where(is_logit, m + lse, zeros)

        # Carry the full padded row: lanes >= H hit zero rows of wh, so only the real
        # hidden lanes feed the next step (no lane slicing needed).
        h = fused


def _rnn_forward_sequence_impl(x_seq, h0, w_i2h, b_i2h, w_i2o, b_i2o):
    """Run the RNN cell over a whole sequence inside one Pallas kernel.

    x_seq: (T, B, input_size)         h0: (B, hidden_size)
    w_i2h: (hidden_size, I+H)  b_i2h: (hidden_size,)   [PyTorch (out, in) layout]
    w_i2o: (output_size, I+H)  b_i2o: (output_size,)
    Returns (logp_seq (T, B, O), h_seq (T, B, H)) == T applications of RNN.forward.
    """
    T, B, I = x_seq.shape
    H = w_i2h.shape[0]
    O = w_i2o.shape[0]
    HO = H + O
    Hp = max(128, ((HO + 127) // 128) * 128)                 # lane-dense fused width
    f32 = jnp.float32

    # Hoisted once per sequence: fuse i2h/i2o, transpose to (in, out), pad out-dim to Hp.
    w_fused_t = jnp.concatenate([w_i2h, w_i2o], axis=0).astype(f32).T        # (I+H, HO)
    w_fused_t = jnp.pad(w_fused_t, ((0, 0), (0, Hp - HO)))                   # (I+H, Hp)
    wx = w_fused_t[:I, :]                                                    # (I, Hp)
    # Lift the hidden-part weight onto the padded (B, Hp) carried state.
    wh = jnp.zeros((Hp, Hp), f32).at[:H, :].set(w_fused_t[I:, :])            # (Hp, Hp)
    b = jnp.pad(jnp.concatenate([b_i2h, b_i2o], axis=0).astype(f32),
                (0, Hp - HO)).reshape(1, Hp)                                 # (1, Hp)

    x2d = x_seq.astype(f32).reshape(T * B, I)                                # (T*B, I)
    h0p = jnp.pad(h0.astype(f32), ((0, 0), (0, Hp - H)))                     # (B, Hp)

    kernel = functools.partial(_rnn_seq_kernel, seq_len=T, batch=B,
                               hidden_size=H, output_size=O)
    vmem = pl.BlockSpec(memory_space=pltpu.MemorySpace.VMEM)

    out2d = pl.pallas_call(
        kernel,
        out_shape=jax.ShapeDtypeStruct((T * B, Hp), f32),
        in_specs=[vmem] * 5,
        out_specs=vmem,
        compiler_params=pltpu.CompilerParams(vmem_limit_bytes=32 << 20),
    )(x2d, h0p, wx, wh, b)

    out = out2d.reshape(T, B, Hp)
    h_seq = out[:, :, :H]
    logp_seq = out[:, :, H:H + O]
    return logp_seq, h_seq


rnn_forward_sequence = jax.jit(_rnn_forward_sequence_impl)


def rnn_forward(x, h, w_i2h, b_i2h, w_i2o, b_i2o):
    """Single-step forward, same semantics as the PyTorch module's forward()."""
    logp_seq, h_seq = rnn_forward_sequence(x[None], h, w_i2h, b_i2h, w_i2o, b_i2o)
    return logp_seq[0], h_seq[0]


def _ref_forward_sequence(x_seq, h0, w_i2h, b_i2h, w_i2o, b_i2o):
    """Pure-JAX reference: T repeated applications of the PyTorch forward."""
    def step(h, x):
        comb = jnp.concatenate([x, h], axis=1)
        new_h = comb @ w_i2h.T + b_i2h
        logits = comb @ w_i2o.T + b_i2o
        return new_h, (jax.nn.log_softmax(logits, axis=1), new_h)

    _, (logp_seq, h_seq) = jax.lax.scan(step, h0, x_seq)
    return logp_seq, h_seq


if __name__ == "__main__":
    batch = 2
    input_size = 16
    hidden_size = 32
    output_size = 64
    seq_len = 8

    key = jax.random.PRNGKey(0)
    k_x, k_wh, k_bh, k_wo, k_bo = jax.random.split(key, 5)

    # PyTorch-Linear-like uniform init.
    fan_in = input_size + hidden_size
    bound = 1.0 / (fan_in ** 0.5)
    w_i2h = jax.random.uniform(k_wh, (hidden_size, fan_in), jnp.float32, -bound, bound)
    b_i2h = jax.random.uniform(k_bh, (hidden_size,), jnp.float32, -bound, bound)
    w_i2o = jax.random.uniform(k_wo, (output_size, fan_in), jnp.float32, -bound, bound)
    b_i2o = jax.random.uniform(k_bo, (output_size,), jnp.float32, -bound, bound)

    x_seq = jax.random.normal(k_x, (seq_len, batch, input_size), jnp.float32)
    h0 = jnp.zeros((batch, hidden_size), jnp.float32)          # initHidden(), per-batch

    # Full-sequence fused kernel.
    logp_seq, h_seq = rnn_forward_sequence(x_seq, h0, w_i2h, b_i2h, w_i2o, b_i2o)
    jax.block_until_ready((logp_seq, h_seq))

    ref_logp, ref_h = _ref_forward_sequence(x_seq, h0, w_i2h, b_i2h, w_i2o, b_i2o)
    assert jnp.allclose(logp_seq, ref_logp, atol=1e-5), "sequence output mismatch"
    assert jnp.allclose(h_seq, ref_h, atol=1e-5), "sequence hidden mismatch"

    # Single-step path (exact module semantics).
    out1, h1 = rnn_forward(x_seq[0], h0, w_i2h, b_i2h, w_i2o, b_i2o)
    comb = jnp.concatenate([x_seq[0], h0], axis=1)
    assert jnp.allclose(out1, jax.nn.log_softmax(comb @ w_i2o.T + b_i2o, axis=1), atol=1e-5)
    assert jnp.allclose(h1, comb @ w_i2h.T + b_i2h, atol=1e-5)

    print("KERNEL_OK")
</pallas_src>

<mosaic_0001>
module attributes {stable_mosaic.version = 11 : i64} {
  func.func @_rnn_seq_kernel(%arg0: memref<16x16xf32, #tpu.memory_space<vmem>>, %arg1: memref<2x128xf32, #tpu.memory_space<vmem>>, %arg2: memref<16x128xf32, #tpu.memory_space<vmem>>, %arg3: memref<128x128xf32, #tpu.memory_space<vmem>>, %arg4: memref<1x128xf32, #tpu.memory_space<vmem>>, %arg5: memref<16x128xf32, #tpu.memory_space<vmem>>) attributes {dimension_semantics = [], scalar_prefetch = 0 : i64, scratch_operands = 0 : i64, tpu.core_type = #tpu.core_type<tc>} {
    %c0 = arith.constant 0 : index
    %c0_0 = arith.constant 0 : index
    %0 = vector.load %arg0[%c0, %c0_0] : memref<16x16xf32, #tpu.memory_space<vmem>>, vector<16x16xf32>
    %c0_1 = arith.constant 0 : index
    %c0_2 = arith.constant 0 : index
    %1 = vector.load %arg2[%c0_1, %c0_2] : memref<16x128xf32, #tpu.memory_space<vmem>>, vector<16x128xf32>
    %cst = arith.constant dense<0.000000e+00> : vector<16x128xf32>
    %2 = tpu.matmul %0, %1, %cst {dimension_numbers = #tpu.dot_dimension_numbers<[1], [0], [0], [1], [0, 0, 1, 1], [], []>} : vector<16x16xf32>, vector<16x128xf32>, vector<16x128xf32> -> vector<16x128xf32>
    %c0_3 = arith.constant 0 : index
    %c0_4 = arith.constant 0 : index
    %3 = vector.load %arg4[%c0_3, %c0_4] : memref<1x128xf32, #tpu.memory_space<vmem>>, vector<1x128xf32>
    %4 = vector.broadcast %3 : vector<1x128xf32> to vector<16x128xf32>
    %5 = arith.addf %2, %4 : vector<16x128xf32>
    %c0_5 = arith.constant 0 : index
    %c0_6 = arith.constant 0 : index
    %6 = vector.load %arg3[%c0_5, %c0_6] : memref<128x128xf32, #tpu.memory_space<vmem>>, vector<128x128xf32>
    %7 = tpu.iota {dimensions = array<i32: 1>} : vector<2x128xi32>
    %c32_i32 = arith.constant 32 : i32
    %8 = vector.broadcast %c32_i32 : i32 to vector<2x128xi32>
    %9 = arith.cmpi sge, %7, %8 : vector<2x128xi32>
    %c96_i32 = arith.constant 96 : i32
    %10 = vector.broadcast %c96_i32 : i32 to vector<2x128xi32>
    %11 = arith.cmpi slt, %7, %10 : vector<2x128xi32>
    %12 = arith.andi %9, %11 : vector<2x128xi1>
    %cst_7 = arith.constant 0xFF800000 : f32
    %13 = vector.broadcast %cst_7 : f32 to vector<2x128xf32>
    %cst_8 = arith.constant 0.000000e+00 : f32
    %14 = vector.broadcast %cst_8 : f32 to vector<2x128xf32>
    %c0_9 = arith.constant 0 : index
    %c0_10 = arith.constant 0 : index
    %15 = vector.load %arg1[%c0_9, %c0_10] : memref<2x128xf32, #tpu.memory_space<vmem>>, vector<2x128xf32>
    %16 = vector.extract_strided_slice %5 {offsets = [0, 0], sizes = [2, 128], strides = [1, 1]} : vector<16x128xf32> to vector<2x128xf32>
    %cst_11 = arith.constant dense<0.000000e+00> : vector<2x128xf32>
    %17 = tpu.matmul %15, %6, %cst_11 {dimension_numbers = #tpu.dot_dimension_numbers<[1], [0], [0], [1], [0, 0, 1, 1], [], []>} : vector<2x128xf32>, vector<128x128xf32>, vector<2x128xf32> -> vector<2x128xf32>
    %18 = arith.addf %16, %17 : vector<2x128xf32>
    %19 = arith.select %12, %18, %13 : vector<2x128xi1>, vector<2x128xf32>
    %cst_12 = arith.constant dense<0xFF800000> : vector<2xf32>
    %20 = vector.multi_reduction <maximumf>, %19, %cst_12 [1] : vector<2x128xf32> to vector<2xf32>
    %21 = vector.shape_cast %20 : vector<2xf32> to vector<2x1xf32>
    %22 = vector.broadcast %21 : vector<2x1xf32> to vector<2x128xf32>
    %23 = arith.subf %19, %22 : vector<2x128xf32>
    %24 = math.exp %23 : vector<2x128xf32>
    %cst_13 = arith.constant dense<0.000000e+00> : vector<2xf32>
    %25 = vector.multi_reduction <add>, %24, %cst_13 [1] : vector<2x128xf32> to vector<2xf32>
    %26 = vector.shape_cast %25 : vector<2xf32> to vector<2x1xf32>
    %27 = math.log %26 : vector<2x1xf32>
    %28 = arith.addf %21, %27 : vector<2x1xf32>
    %29 = vector.shape_cast %28 : vector<2x1xf32> to vector<2x1xf32>
    %30 = vector.broadcast %29 : vector<2x1xf32> to vector<2x128xf32>
    %31 = arith.select %12, %30, %14 : vector<2x128xi1>, vector<2x128xf32>
    %32 = arith.subf %18, %31 : vector<2x128xf32>
    %c0_14 = arith.constant 0 : index
    %c0_15 = arith.constant 0 : index
    %33 = vector.load %arg5[%c0_14, %c0_15] : memref<16x128xf32, #tpu.memory_space<vmem>>, vector<2x128xf32>
    tpu.vector_store %arg5[%c0_14, %c0_15], %32 {strides = array<i32>} : memref<16x128xf32, #tpu.memory_space<vmem>>, vector<2x128xf32>,
    %34 = vector.extract_strided_slice %5 {offsets = [2, 0], sizes = [2, 128], strides = [1, 1]} : vector<16x128xf32> to vector<2x128xf32>
    %cst_16 = arith.constant dense<0.000000e+00> : vector<2x128xf32>
    %35 = tpu.matmul %18, %6, %cst_16 {dimension_numbers = #tpu.dot_dimension_numbers<[1], [0], [0], [1], [0, 0, 1, 1], [], []>} : vector<2x128xf32>, vector<128x128xf32>, vector<2x128xf32> -> vector<2x128xf32>
    %36 = arith.addf %34, %35 : vector<2x128xf32>
    %37 = arith.select %12, %36, %13 : vector<2x128xi1>, vector<2x128xf32>
    %cst_17 = arith.constant dense<0xFF800000> : vector<2xf32>
    %38 = vector.multi_reduction <maximumf>, %37, %cst_17 [1] : vector<2x128xf32> to vector<2xf32>
    %39 = vector.shape_cast %38 : vector<2xf32> to vector<2x1xf32>
    %40 = vector.broadcast %39 : vector<2x1xf32> to vector<2x128xf32>
    %41 = arith.subf %37, %40 : vector<2x128xf32>
    %42 = math.exp %41 : vector<2x128xf32>
    %cst_18 = arith.constant dense<0.000000e+00> : vector<2xf32>
    %43 = vector.multi_reduction <add>, %42, %cst_18 [1] : vector<2x128xf32> to vector<2xf32>
    %44 = vector.shape_cast %43 : vector<2xf32> to vector<2x1xf32>
    %45 = math.log %44 : vector<2x1xf32>
    %46 = arith.addf %39, %45 : vector<2x1xf32>
    %47 = vector.shape_cast %46 : vector<2x1xf32> to vector<2x1xf32>
    %48 = vector.broadcast %47 : vector<2x1xf32> to vector<2x128xf32>
    %49 = arith.select %12, %48, %14 : vector<2x128xi1>, vector<2x128xf32>
    %50 = arith.subf %36, %49 : vector<2x128xf32>
    %c2 = arith.constant 2 : index
    %c0_19 = arith.constant 0 : index
    %51 = vector.load %arg5[%c2, %c0_19] : memref<16x128xf32, #tpu.memory_space<vmem>>, vector<2x128xf32>
    tpu.vector_store %arg5[%c2, %c0_19], %50 {strides = array<i32>} : memref<16x128xf32, #tpu.memory_space<vmem>>, vector<2x128xf32>,
    %52 = vector.extract_strided_slice %5 {offsets = [4, 0], sizes = [2, 128], strides = [1, 1]} : vector<16x128xf32> to vector<2x128xf32>
    %cst_20 = arith.constant dense<0.000000e+00> : vector<2x128xf32>
    %53 = tpu.matmul %36, %6, %cst_20 {dimension_numbers = #tpu.dot_dimension_numbers<[1], [0], [0], [1], [0, 0, 1, 1], [], []>} : vector<2x128xf32>, vector<128x128xf32>, vector<2x128xf32> -> vector<2x128xf32>
    %54 = arith.addf %52, %53 : vector<2x128xf32>
    %55 = arith.select %12, %54, %13 : vector<2x128xi1>, vector<2x128xf32>
    %cst_21 = arith.constant dense<0xFF800000> : vector<2xf32>
    %56 = vector.multi_reduction <maximumf>, %55, %cst_21 [1] : vector<2x128xf32> to vector<2xf32>
    %57 = vector.shape_cast %56 : vector<2xf32> to vector<2x1xf32>
    %58 = vector.broadcast %57 : vector<2x1xf32> to vector<2x128xf32>
    %59 = arith.subf %55, %58 : vector<2x128xf32>
    %60 = math.exp %59 : vector<2x128xf32>
    %cst_22 = arith.constant dense<0.000000e+00> : vector<2xf32>
    %61 = vector.multi_reduction <add>, %60, %cst_22 [1] : vector<2x128xf32> to vector<2xf32>
    %62 = vector.shape_cast %61 : vector<2xf32> to vector<2x1xf32>
    %63 = math.log %62 : vector<2x1xf32>
    %64 = arith.addf %57, %63 : vector<2x1xf32>
    %65 = vector.shape_cast %64 : vector<2x1xf32> to vector<2x1xf32>
    %66 = vector.broadcast %65 : vector<2x1xf32> to vector<2x128xf32>
    %67 = arith.select %12, %66, %14 : vector<2x128xi1>, vector<2x128xf32>
    %68 = arith.subf %54, %67 : vector<2x128xf32>
    %c4 = arith.constant 4 : index
    %c0_23 = arith.constant 0 : index
    %69 = vector.load %arg5[%c4, %c0_23] : memref<16x128xf32, #tpu.memory_space<vmem>>, vector<2x128xf32>
    tpu.vector_store %arg5[%c4, %c0_23], %68 {strides = array<i32>} : memref<16x128xf32, #tpu.memory_space<vmem>>, vector<2x128xf32>,
    %70 = vector.extract_strided_slice %5 {offsets = [6, 0], sizes = [2, 128], strides = [1, 1]} : vector<16x128xf32> to vector<2x128xf32>
    %cst_24 = arith.constant dense<0.000000e+00> : vector<2x128xf32>
    %71 = tpu.matmul %54, %6, %cst_24 {dimension_numbers = #tpu.dot_dimension_numbers<[1], [0], [0], [1], [0, 0, 1, 1], [], []>} : vector<2x128xf32>, vector<128x128xf32>, vector<2x128xf32> -> vector<2x128xf32>
    %72 = arith.addf %70, %71 : vector<2x128xf32>
    %73 = arith.select %12, %72, %13 : vector<2x128xi1>, vector<2x128xf32>
    %cst_25 = arith.constant dense<0xFF800000> : vector<2xf32>
    %74 = vector.multi_reduction <maximumf>, %73, %cst_25 [1] : vector<2x128xf32> to vector<2xf32>
    %75 = vector.shape_cast %74 : vector<2xf32> to vector<2x1xf32>
    %76 = vector.broadcast %75 : vector<2x1xf32> to vector<2x128xf32>
    %77 = arith.subf %73, %76 : vector<2x128xf32>
    %78 = math.exp %77 : vector<2x128xf32>
    %cst_26 = arith.constant dense<0.000000e+00> : vector<2xf32>
    %79 = vector.multi_reduction <add>, %78, %cst_26 [1] : vector<2x128xf32> to vector<2xf32>
    %80 = vector.shape_cast %79 : vector<2xf32> to vector<2x1xf32>
    %81 = math.log %80 : vector<2x1xf32>
    %82 = arith.addf %75, %81 : vector<2x1xf32>
    %83 = vector.shape_cast %82 : vector<2x1xf32> to vector<2x1xf32>
    %84 = vector.broadcast %83 : vector<2x1xf32> to vector<2x128xf32>
    %85 = arith.select %12, %84, %14 : vector<2x128xi1>, vector<2x128xf32>
    %86 = arith.subf %72, %85 : vector<2x128xf32>
    %c6 = arith.constant 6 : index
    %c0_27 = arith.constant 0 : index
    %87 = vector.load %arg5[%c6, %c0_27] : memref<16x128xf32, #tpu.memory_space<vmem>>, vector<2x128xf32>
    tpu.vector_store %arg5[%c6, %c0_27], %86 {strides = array<i32>} : memref<16x128xf32, #tpu.memory_space<vmem>>, vector<2x128xf32>,
    %88 = vector.extract_strided_slice %5 {offsets = [8, 0], sizes = [2, 128], strides = [1, 1]} : vector<16x128xf32> to vector<2x128xf32>
    %cst_28 = arith.constant dense<0.000000e+00> : vector<2x128xf32>
    %89 = tpu.matmul %72, %6, %cst_28 {dimension_numbers = #tpu.dot_dimension_numbers<[1], [0], [0], [1], [0, 0, 1, 1], [], []>} : vector<2x128xf32>, vector<128x128xf32>, vector<2x128xf32> -> vector<2x128xf32>
    %90 = arith.addf %88, %89 : vector<2x128xf32>
    %91 = arith.select %12, %90, %13 : vector<2x128xi1>, vector<2x128xf32>
    %cst_29 = arith.constant dense<0xFF800000> : vector<2xf32>
    %92 = vector.multi_reduction <maximumf>, %91, %cst_29 [1] : vector<2x128xf32> to vector<2xf32>
    %93 = vector.shape_cast %92 : vector<2xf32> to vector<2x1xf32>
    %94 = vector.broadcast %93 : vector<2x1xf32> to vector<2x128xf32>
    %95 = arith.subf %91, %94 : vector<2x128xf32>
    %96 = math.exp %95 : vector<2x128xf32>
    %cst_30 = arith.constant dense<0.000000e+00> : vector<2xf32>
    %97 = vector.multi_reduction <add>, %96, %cst_30 [1] : vector<2x128xf32> to vector<2xf32>
    %98 = vector.shape_cast %97 : vector<2xf32> to vector<2x1xf32>
    %99 = math.log %98 : vector<2x1xf32>
    %100 = arith.addf %93, %99 : vector<2x1xf32>
    %101 = vector.shape_cast %100 : vector<2x1xf32> to vector<2x1xf32>
    %102 = vector.broadcast %101 : vector<2x1xf32> to vector<2x128xf32>
    %103 = arith.select %12, %102, %14 : vector<2x128xi1>, vector<2x128xf32>
    %104 = arith.subf %90, %103 : vector<2x128xf32>
    %c8 = arith.constant 8 : index
    %c0_31 = arith.constant 0 : index
    %105 = vector.load %arg5[%c8, %c0_31] : memref<16x128xf32, #tpu.memory_space<vmem>>, vector<2x128xf32>
    tpu.vector_store %arg5[%c8, %c0_31], %104 {strides = array<i32>} : memref<16x128xf32, #tpu.memory_space<vmem>>, vector<2x128xf32>,
    %106 = vector.extract_strided_slice %5 {offsets = [10, 0], sizes = [2, 128], strides = [1, 1]} : vector<16x128xf32> to vector<2x128xf32>
    %cst_32 = arith.constant dense<0.000000e+00> : vector<2x128xf32>
    %107 = tpu.matmul %90, %6, %cst_32 {dimension_numbers = #tpu.dot_dimension_numbers<[1], [0], [0], [1], [0, 0, 1, 1], [], []>} : vector<2x128xf32>, vector<128x128xf32>, vector<2x128xf32> -> vector<2x128xf32>
    %108 = arith.addf %106, %107 : vector<2x128xf32>
    %109 = arith.select %12, %108, %13 : vector<2x128xi1>, vector<2x128xf32>
    %cst_33 = arith.constant dense<0xFF800000> : vector<2xf32>
    %110 = vector.multi_reduction <maximumf>, %109, %cst_33 [1] : vector<2x128xf32> to vector<2xf32>
    %111 = vector.shape_cast %110 : vector<2xf32> to vector<2x1xf32>
    %112 = vector.broadcast %111 : vector<2x1xf32> to vector<2x128xf32>
    %113 = arith.subf %109, %112 : vector<2x128xf32>
    %114 = math.exp %113 : vector<2x128xf32>
    %cst_34 = arith.constant dense<0.000000e+00> : vector<2xf32>
    %115 = vector.multi_reduction <add>, %114, %cst_34 [1] : vector<2x128xf32> to vector<2xf32>
    %116 = vector.shape_cast %115 : vector<2xf32> to vector<2x1xf32>
    %117 = math.log %116 : vector<2x1xf32>
    %118 = arith.addf %111, %117 : vector<2x1xf32>
    %119 = vector.shape_cast %118 : vector<2x1xf32> to vector<2x1xf32>
    %120 = vector.broadcast %119 : vector<2x1xf32> to vector<2x128xf32>
    %121 = arith.select %12, %120, %14 : vector<2x128xi1>, vector<2x128xf32>
    %122 = arith.subf %108, %121 : vector<2x128xf32>
    %c10 = arith.constant 10 : index
    %c0_35 = arith.constant 0 : index
    %123 = vector.load %arg5[%c10, %c0_35] : memref<16x128xf32, #tpu.memory_space<vmem>>, vector<2x128xf32>
    tpu.vector_store %arg5[%c10, %c0_35], %122 {strides = array<i32>} : memref<16x128xf32, #tpu.memory_space<vmem>>, vector<2x128xf32>,
    %124 = vector.extract_strided_slice %5 {offsets = [12, 0], sizes = [2, 128], strides = [1, 1]} : vector<16x128xf32> to vector<2x128xf32>
    %cst_36 = arith.constant dense<0.000000e+00> : vector<2x128xf32>
    %125 = tpu.matmul %108, %6, %cst_36 {dimension_numbers = #tpu.dot_dimension_numbers<[1], [0], [0], [1], [0, 0, 1, 1], [], []>} : vector<2x128xf32>, vector<128x128xf32>, vector<2x128xf32> -> vector<2x128xf32>
    %126 = arith.addf %124, %125 : vector<2x128xf32>
    %127 = arith.select %12, %126, %13 : vector<2x128xi1>, vector<2x128xf32>
    %cst_37 = arith.constant dense<0xFF800000> : vector<2xf32>
    %128 = vector.multi_reduction <maximumf>, %127, %cst_37 [1] : vector<2x128xf32> to vector<2xf32>
    %129 = vector.shape_cast %128 : vector<2xf32> to vector<2x1xf32>
    %130 = vector.broadcast %129 : vector<2x1xf32> to vector<2x128xf32>
    %131 = arith.subf %127, %130 : vector<2x128xf32>
    %132 = math.exp %131 : vector<2x128xf32>
    %cst_38 = arith.constant dense<0.000000e+00> : vector<2xf32>
    %133 = vector.multi_reduction <add>, %132, %cst_38 [1] : vector<2x128xf32> to vector<2xf32>
    %134 = vector.shape_cast %133 : vector<2xf32> to vector<2x1xf32>
    %135 = math.log %134 : vector<2x1xf32>
    %136 = arith.addf %129, %135 : vector<2x1xf32>
    %137 = vector.shape_cast %136 : vector<2x1xf32> to vector<2x1xf32>
    %138 = vector.broadcast %137 : vector<2x1xf32> to vector<2x128xf32>
    %139 = arith.select %12, %138, %14 : vector<2x128xi1>, vector<2x128xf32>
    %140 = arith.subf %126, %139 : vector<2x128xf32>
    %c12 = arith.constant 12 : index
    %c0_39 = arith.constant 0 : index
    %141 = vector.load %arg5[%c12, %c0_39] : memref<16x128xf32, #tpu.memory_space<vmem>>, vector<2x128xf32>
    tpu.vector_store %arg5[%c12, %c0_39], %140 {strides = array<i32>} : memref<16x128xf32, #tpu.memory_space<vmem>>, vector<2x128xf32>,
    %142 = vector.extract_strided_slice %5 {offsets = [14, 0], sizes = [2, 128], strides = [1, 1]} : vector<16x128xf32> to vector<2x128xf32>
    %cst_40 = arith.constant dense<0.000000e+00> : vector<2x128xf32>
    %143 = tpu.matmul %126, %6, %cst_40 {dimension_numbers = #tpu.dot_dimension_numbers<[1], [0], [0], [1], [0, 0, 1, 1], [], []>} : vector<2x128xf32>, vector<128x128xf32>, vector<2x128xf32> -> vector<2x128xf32>
    %144 = arith.addf %142, %143 : vector<2x128xf32>
    %145 = arith.select %12, %144, %13 : vector<2x128xi1>, vector<2x128xf32>
    %cst_41 = arith.constant dense<0xFF800000> : vector<2xf32>
    %146 = vector.multi_reduction <maximumf>, %145, %cst_41 [1] : vector<2x128xf32> to vector<2xf32>
    %147 = vector.shape_cast %146 : vector<2xf32> to vector<2x1xf32>
    %148 = vector.broadcast %147 : vector<2x1xf32> to vector<2x128xf32>
    %149 = arith.subf %145, %148 : vector<2x128xf32>
    %150 = math.exp %149 : vector<2x128xf32>
    %cst_42 = arith.constant dense<0.000000e+00> : vector<2xf32>
    %151 = vector.multi_reduction <add>, %150, %cst_42 [1] : vector<2x128xf32> to vector<2xf32>
    %152 = vector.shape_cast %151 : vector<2xf32> to vector<2x1xf32>
    %153 = math.log %152 : vector<2x1xf32>
    %154 = arith.addf %147, %153 : vector<2x1xf32>
    %155 = vector.shape_cast %154 : vector<2x1xf32> to vector<2x1xf32>
    %156 = vector.broadcast %155 : vector<2x1xf32> to vector<2x128xf32>
    %157 = arith.select %12, %156, %14 : vector<2x128xi1>, vector<2x128xf32>
    %158 = arith.subf %144, %157 : vector<2x128xf32>
    %c14 = arith.constant 14 : index
    %c0_43 = arith.constant 0 : index
    %159 = vector.load %arg5[%c14, %c0_43] : memref<16x128xf32, #tpu.memory_space<vmem>>, vector<2x128xf32>
    tpu.vector_store %arg5[%c14, %c0_43], %158 {strides = array<i32>} : memref<16x128xf32, #tpu.memory_space<vmem>>, vector<2x128xf32>,
    return
  }
}

</mosaic_0001>

<llo_original>
// kernel: _rnn_forward_sequence_impl.1
$region0: #{_rnn_forward_sequence_impl.1}
  #allocation0 [shape = 'u32[]', space=smem, size = 0x4, offset = 0x4, fixed_abs, tag = 'smem constant byte address 0x4 - core index']
  #allocation1 [shape = 'u32[144,128]{1,0:T(1,128)}', space=vmem, size = 0x12000, scoped, tag = 'internal scratch']
  %s0 = inlined_call_operand.vmem [shape: f32[16,16], index: 0, kind: input, shape index: {}]
  %s1 = inlined_call_operand.vmem [shape: f32[2,128], index: 1, kind: input, shape index: {}]
  %s2 = inlined_call_operand.vmem [shape: f32[16,128], index: 2, kind: input, shape index: {}]
  %s3 = inlined_call_operand.vmem [shape: f32[128,128], index: 3, kind: input, shape index: {}]
  %s4 = inlined_call_operand.vmem [shape: f32[1,128], index: 4, kind: input, shape index: {}]
  %s5 = inlined_call_operand.vmem [shape: f32[16,128], index: 5, kind: output, shape index: {}]
  %s6 = sld [smem:[#allocation0]]
  $region30: #{_rnn_forward_sequence_impl.1} parent=0
    _
  %s8 = ssub.s32 1, %s6
  %s9 = scalar_select 0, %s8, %s6
  // Predicated region
  $region2: #{_rnn_forward_sequence_impl.1} parent=0 // pred_check
    _
  $region3: #{_rnn_forward_sequence_impl.1} parent=0 // pred_check_branch
    %11 = sbr.rel (0) target = $region5
  $region4: #{_rnn_forward_sequence_impl.1} parent=0 // pred_region
    _
  $region5: #{_rnn_forward_sequence_impl.1} parent=0 // pred_fallthru
    _
  // Predicated region
  $region6: #{_rnn_forward_sequence_impl.1} parent=0 // pred_check
    _
  $region7: #{_rnn_forward_sequence_impl.1} parent=0 // pred_check_branch
    %13 = sbr.rel (0) target = $region9
  $region8: #{_rnn_forward_sequence_impl.1} parent=0 // pred_region
    _
  $region9: #{_rnn_forward_sequence_impl.1} parent=0 // pred_fallthru
    _
  // Predicated region
  $region10: #{_rnn_forward_sequence_impl.1} parent=0 // pred_check
    _
  $region11: #{_rnn_forward_sequence_impl.1} parent=0 // pred_check_branch
    %15 = sbr.rel (0) target = $region13
  $region12: #{_rnn_forward_sequence_impl.1} parent=0 // pred_region
    _
  $region13: #{_rnn_forward_sequence_impl.1} parent=0 // pred_fallthru
    _
  // Predicated region
  $region14: #{_rnn_forward_sequence_impl.1} parent=0 // pred_check
    _
  $region15: #{_rnn_forward_sequence_impl.1} parent=0 // pred_check_branch
    %17 = sbr.rel (0) target = $region17
  $region16: #{_rnn_forward_sequence_impl.1} parent=0 // pred_region
    _
  $region17: #{_rnn_forward_sequence_impl.1} parent=0 // pred_fallthru
    _
  // Predicated region
  $region18: #{_rnn_forward_sequence_impl.1} parent=0 // pred_check
    _
  $region19: #{_rnn_forward_sequence_impl.1} parent=0 // pred_check_branch
    %19 = sbr.rel (0) target = $region21
  $region20: #{_rnn_forward_sequence_impl.1} parent=0 // pred_region
    _
  $region21: #{_rnn_forward_sequence_impl.1} parent=0 // pred_fallthru
    _
  %v20 = vld [vmem:[%s0] sm:$0xff]
  %v21 = vld [vmem:[%s0 + $0x8] sm:$0xff]
  %v22 = vld [vmem:[%s2] sm:$0xff]
  %v23 = vld [vmem:[%s2 + $0x8] sm:$0xff]
  %v24 = vld [vmem:[%s4] sm:$0x1]
  %v26 = vlaneseq
  %v27 = vshrl.u32 %v26, 7
  %v28 = vsub.s32 0, %v27
  %v29 = vrot.slane %v24, %v28
  %vm31 = vcmask 130048
  %v33 = vsel %vm31, %v20, 0
  %v36 = vsel %vm31, %v21, 0
  %38 = vmatprep.subr.mxu0 0.0
  %39 = vmatpush1.msra.mxu0 %v22
  %40 = vmatprep.subr.mxu0 0.0
  %41 = vmatpush1.msra.mxu0 %v23
  %42 = vmatprep.subr.mxu0 0.0
  %43 = vmatpush1.msra.mxu0 0.0
  %44 = vmatprep.subr.mxu0 0.0
  %45 = vmatpush1.msra.mxu0 0.0
  %46 = vmatprep.subr.mxu0 0.0
  %47 = vmatpush1.msra.mxu0 0.0
  %48 = vmatprep.subr.mxu0 0.0
  %49 = vmatpush1.msra.mxu0 0.0
  %50 = vmatprep.subr.mxu0 0.0
  %51 = vmatpush1.msra.mxu0 0.0
  %52 = vmatprep.subr.mxu0 0.0
  %53 = vmatpush1.msra.mxu0 0.0
  %54 = vmatprep.subr.mxu0 0.0
  %55 = vmatpush1.msra.mxu0 0.0
  %56 = vmatprep.subr.mxu0 0.0
  %57 = vmatpush1.msra.mxu0 0.0
  %58 = vmatprep.subr.mxu0 0.0
  %59 = vmatpush1.msra.mxu0 0.0
  %60 = vmatprep.subr.mxu0 0.0
  %61 = vmatpush1.msra.mxu0 0.0
  %62 = vmatprep.subr.mxu0 0.0
  %63 = vmatpush1.msra.mxu0 0.0
  %64 = vmatprep.subr.mxu0 0.0
  %65 = vmatpush1.msra.mxu0 0.0
  %66 = vmatprep.subr.mxu0 0.0
  %67 = vmatpush1.msra.mxu0 0.0
  %68 = vmatprep.subr.mxu0 0.0
  %69 = vmatpush1.msra.mxu0 0.0
  %70 = vmatprep.subr.mxu0 0.0
  %71 = vmatpush1.msra.mxu0 0.0
  %72 = vmatprep.subr.mxu0 0.0
  %73 = vmatpush1.msra.mxu0 0.0
  %74 = vmatprep.subr.mxu0 0.0
  %75 = vmatpush1.msra.mxu0 0.0
  %76 = vmatprep.subr.mxu0 0.0
  %77 = vmatpush1.msra.mxu0 0.0
  %78 = vmatprep.subr.mxu0 0.0
  %79 = vmatpush1.msra.mxu0 0.0
  %80 = vmatprep.subr.mxu0 0.0
  %81 = vmatpush1.msra.mxu0 0.0
  %82 = vmatprep.subr.mxu0 0.0
  %83 = vmatpush1.msra.mxu0 0.0
  %84 = vmatprep.subr.mxu0 0.0
  %85 = vmatpush1.msra.mxu0 0.0
  %86 = vmatprep.subr.mxu0 0.0
  %87 = vmatpush1.msra.mxu0 0.0
  %88 = vmatprep.subr.mxu0 0.0
  %89 = vmatpush1.msra.mxu0 0.0
  %90 = vmatprep.subr.mxu0 0.0
  %91 = vmatpush1.msra.mxu0 0.0
  %92 = vmatprep.subr.mxu0 0.0
  %93 = vmatpush1.msra.mxu0 0.0
  %94 = vmatprep.subr.mxu0 0.0
  %95 = vmatpush1.msra.mxu0 0.0
  %96 = vmatprep.subr.mxu0 0.0
  %97 = vmatpush1.msra.mxu0 0.0
  %98 = vmatprep.subr.mxu0 0.0
  %99 = vmatpush1.msra.mxu0 0.0
  %100 = vmatprep.subr.mxu0 0.0
  %101 = vmatpush1.msra.mxu0 0.0
  %102 = vmatprep.mubr.f32.mxu0 0.0
  %103 = vmatmul.mubr.f32.gmra.mrb[0].mxu0 %v33
  %v104 = vpop.f32.mrb[0].mxu0
  %v105 = vadd.f32 %v29, %v104
  %v106 = vpop.f32.mrb[0].mxu0
  %107 = vmatprep.mubr.f32.mxu0 0.0
  %108 = vmatmul.mubr.f32.gmra.mrb[0].mxu0 %v36
  %v109 = vpop.f32.mrb[0].mxu0
  %v110 = vadd.f32 %v29, %v109
  %v111 = vpop.f32.mrb[0].mxu0
  %112 = vdwg.mxu0
  %v113 = vld [vmem:[%s3] sm:$0xff]
  %v114 = vld [vmem:[%s3 + $0x8] sm:$0xff]
  %v115 = vld [vmem:[%s3 + $0x10] sm:$0xff]
  %v116 = vld [vmem:[%s3 + $0x18] sm:$0xff]
  %v117 = vld [vmem:[%s3 + $0x20] sm:$0xff]
  %v118 = vld [vmem:[%s3 + $0x28] sm:$0xff]
  %v119 = vld [vmem:[%s3 + $0x30] sm:$0xff]
  %v120 = vld [vmem:[%s3 + $0x38] sm:$0xff]
  %v121 = vld [vmem:[%s3 + $0x40] sm:$0xff]
  %v122 = vld [vmem:[%s3 + $0x48] sm:$0xff]
  %v123 = vld [vmem:[%s3 + $0x50] sm:$0xff]
  %v124 = vld [vmem:[%s3 + $0x58] sm:$0xff]
  %v125 = vld [vmem:[%s3 + $0x60] sm:$0xff]
  %v126 = vld [vmem:[%s3 + $0x68] sm:$0xff]
  %v127 = vld [vmem:[%s3 + $0x70] sm:$0xff]
  %v128 = vld [vmem:[%s3 + $0x78] sm:$0xff]
  %v129 = vlaneseq
  %v130 = vand.u32 %v129, 127
  %vm131 = vcmp.ge.s32.totalorder %v130, 32
  %vm132 = vcmp.lt.s32.totalorder %v130, 96
  %vm133 = vmand %vm131, %vm132
  %v134 = vld [vmem:[%s1] sm:$0x3]
  %135 = vmatprep.subr.mxu0 0.0
  %136 = vmatpush1.msra.mxu0 %v113
  %137 = vmatprep.subr.mxu0 0.0
  %138 = vmatpush1.msra.mxu0 %v114
  %139 = vmatprep.subr.mxu0 0.0
  %140 = vmatpush1.msra.mxu0 %v115
  %141 = vmatprep.subr.mxu0 0.0
  %142 = vmatpush1.msra.mxu0 %v116
  %143 = vmatprep.subr.mxu0 0.0
  %144 = vmatpush1.msra.mxu0 %v117
  %145 = vmatprep.subr.mxu0 0.0
  %146 = vmatpush1.msra.mxu0 %v118
  %147 = vmatprep.subr.mxu0 0.0
  %148 = vmatpush1.msra.mxu0 %v119
  %149 = vmatprep.subr.mxu0 0.0
  %150 = vmatpush1.msra.mxu0 %v120
  %151 = vmatprep.subr.mxu0 0.0
  %152 = vmatpush1.msra.mxu0 %v121
  %153 = vmatprep.subr.mxu0 0.0
  %154 = vmatpush1.msra.mxu0 %v122
  %155 = vmatprep.subr.mxu0 0.0
  %156 = vmatpush1.msra.mxu0 %v123
  %157 = vmatprep.subr.mxu0 0.0
  %158 = vmatpush1.msra.mxu0 %v124
  %159 = vmatprep.subr.mxu0 0.0
  %160 = vmatpush1.msra.mxu0 %v125
  %161 = vmatprep.subr.mxu0 0.0
  %162 = vmatpush1.msra.mxu0 %v126
  %163 = vmatprep.subr.mxu0 0.0
  %164 = vmatpush1.msra.mxu0 %v127
  %165 = vmatprep.subr.mxu0 0.0
  %166 = vmatpush1.msra.mxu0 %v128
  %167 = vmatprep.subr.mxu0 0.0
  %168 = vmatpush1.msra.mxu0 0.0
  %169 = vmatprep.subr.mxu0 0.0
  %170 = vmatpush1.msra.mxu0 0.0
  %171 = vmatprep.subr.mxu0 0.0
  %172 = vmatpush1.msra.mxu0 0.0
  %173 = vmatprep.subr.mxu0 0.0
  %174 = vmatpush1.msra.mxu0 0.0
  %175 = vmatprep.subr.mxu0 0.0
  %176 = vmatpush1.msra.mxu0 0.0
  %177 = vmatprep.subr.mxu0 0.0
  %178 = vmatpush1.msra.mxu0 0.0
  %179 = vmatprep.subr.mxu0 0.0
  %180 = vmatpush1.msra.mxu0 0.0
  %181 = vmatprep.subr.mxu0 0.0
  %182 = vmatpush1.msra.mxu0 0.0
  %183 = vmatprep.subr.mxu0 0.0
  %184 = vmatpush1.msra.mxu0 0.0
  %185 = vmatprep.subr.mxu0 0.0
  %186 = vmatpush1.msra.mxu0 0.0
  %187 = vmatprep.subr.mxu0 0.0
  %188 = vmatpush1.msra.mxu0 0.0
  %189 = vmatprep.subr.mxu0 0.0
  %190 = vmatpush1.msra.mxu0 0.0
  %191 = vmatprep.subr.mxu0 0.0
  %192 = vmatpush1.msra.mxu0 0.0
  %193 = vmatprep.subr.mxu0 0.0
  %194 = vmatpush1.msra.mxu0 0.0
  %195 = vmatprep.subr.mxu0 0.0
  %196 = vmatpush1.msra.mxu0 0.0
  %197 = vmatprep.subr.mxu0 0.0
  %198 = vmatpush1.msra.mxu0 0.0
  %199 = vmatprep.mubr.f32.mxu0 0.0
  %200 = vmatmul.mubr.f32.gmra.mrb[0].mxu0 %v134
  %v201 = vpop.f32.mrb[0].mxu0
  %v202 = vadd.f32 0.0, %v201
  %v203 = vpop.f32.mrb[0].mxu0
  %204 = vdwg.mxu0
  %v205 = vadd.f32 %v105, %v202
  %v206 = vsel %vm133, %v205, -inf
  %vm207 = vcmask 1041408
  %v208 = vsel %vm207, %v206, -inf
  %209 = vmax.xlane.f32.xlu0 %v208
  %v210 = vpop.xlane.xlu0 %209
  %v211 = vsub.f32 %v206, %v210
  %v212 = vmul.f32 %v211, 1.442695
  %v213 = vpow.pop %v212
  %v214 = vsel %vm207, %v213, 0.0
  %215 = vadd.xlane.f32.xlu0 %v214
  %v216 = vpop.xlane.xlu0 %215
  %v217 = vlog2.pop %v216
  %v218 = vmul.f32 %v217, 0.6931472
  %v219 = vadd.f32 %v210, %v218
  %v220 = vsel %vm133, %v219, 0.0
  %v221 = vsub.f32 %v205, %v220
  %222 = vst [vmem:[%s5] sm:$0x3] %v221
  %223 = vmatprep.subr.mxu0 0.0
  %224 = vmatpush1.msra.mxu0 %v113
  %225 = vmatprep.subr.mxu0 0.0
  %226 = vmatpush1.msra.mxu0 %v114
  %227 = vmatprep.subr.mxu0 0.0
  %228 = vmatpush1.msra.mxu0 %v115
  %229 = vmatprep.subr.mxu0 0.0
  %230 = vmatpush1.msra.mxu0 %v116
  %231 = vmatprep.subr.mxu0 0.0
  %232 = vmatpush1.msra.mxu0 %v117
  %233 = vmatprep.subr.mxu0 0.0
  %234 = vmatpush1.msra.mxu0 %v118
  %235 = vmatprep.subr.mxu0 0.0
  %236 = vmatpush1.msra.mxu0 %v119
  %237 = vmatprep.subr.mxu0 0.0
  %238 = vmatpush1.msra.mxu0 %v120
  %239 = vmatprep.subr.mxu0 0.0
  %240 = vmatpush1.msra.mxu0 %v121
  %241 = vmatprep.subr.mxu0 0.0
  %242 = vmatpush1.msra.mxu0 %v122
  %243 = vmatprep.subr.mxu0 0.0
  %244 = vmatpush1.msra.mxu0 %v123
  %245 = vmatprep.subr.mxu0 0.0
  %246 = vmatpush1.msra.mxu0 %v124
  %247 = vmatprep.subr.mxu0 0.0
  %248 = vmatpush1.msra.mxu0 %v125
  %249 = vmatprep.subr.mxu0 0.0
  %250 = vmatpush1.msra.mxu0 %v126
  %251 = vmatprep.subr.mxu0 0.0
  %252 = vmatpush1.msra.mxu0 %v127
  %253 = vmatprep.subr.mxu0 0.0
  %254 = vmatpush1.msra.mxu0 %v128
  %255 = vmatprep.subr.mxu0 0.0
  %256 = vmatpush1.msra.mxu0 0.0
  %257 = vmatprep.subr.mxu0 0.0
  %258 = vmatpush1.msra.mxu0 0.0
  %259 = vmatprep.subr.mxu0 0.0
  %260 = vmatpush1.msra.mxu0 0.0
  %261 = vmatprep.subr.mxu0 0.0
  %262 = vmatpush1.msra.mxu0 0.0
  %263 = vmatprep.subr.mxu0 0.0
  %264 = vmatpush1.msra.mxu0 0.0
  %265 = vmatprep.subr.mxu0 0.0
  %266 = vmatpush1.msra.mxu0 0.0
  %267 = vmatprep.subr.mxu0 0.0
  %268 = vmatpush1.msra.mxu0 0.0
  %269 = vmatprep.subr.mxu0 0.0
  %270 = vmatpush1.msra.mxu0 0.0
  %271 = vmatprep.subr.mxu0 0.0
  %272 = vmatpush1.msra.mxu0 0.0
  %273 = vmatprep.subr.mxu0 0.0
  %274 = vmatpush1.msra.mxu0 0.0
  %275 = vmatprep.subr.mxu0 0.0
  %276 = vmatpush1.msra.mxu0 0.0
  %277 = vmatprep.subr.mxu0 0.0
  %278 = vmatpush1.msra.mxu0 0.0
  %279 = vmatprep.subr.mxu0 0.0
  %280 = vmatpush1.msra.mxu0 0.0
  %281 = vmatprep.subr.mxu0 0.0
  %282 = vmatpush1.msra.mxu0 0.0
  %283 = vmatprep.subr.mxu0 0.0
  %284 = vmatpush1.msra.mxu0 0.0
  %285 = vmatprep.subr.mxu0 0.0
  %286 = vmatpush1.msra.mxu0 0.0
  %287 = vmatprep.mubr.f32.mxu0 0.0
  %288 = vmatmul.mubr.f32.gmra.mrb[0].mxu0 %v205
  %v289 = vpop.f32.mrb[0].mxu0
  %v290 = vadd.f32 0.0, %v289
  %v291 = vpop.f32.mrb[0].mxu0
  %292 = vdwg.mxu0
  %v294 = vrot.slane %v290, 6
  %v296 = vadd.f32 %v105, %v294
  %v297 = vsel %vm133, %v296, -inf
  %vm298 = vcmask 1043458
  %v299 = vsel %vm298, %v297, -inf
  %300 = vmax.xlane.f32.xlu0 %v299
  %v301 = vpop.xlane.xlu0 %300
  %v302 = vsub.f32 %v297, %v301
  %v303 = vmul.f32 %v302, 1.442695
  %v304 = vpow.pop %v303
  %v305 = vsel %vm298, %v304, 0.0
  %306 = vadd.xlane.f32.xlu0 %v305
  %v307 = vpop.xlane.xlu0 %306
  %v308 = vlog2.pop %v307
  %v309 = vmul.f32 %v308, 0.6931472
  %v310 = vadd.f32 %v301, %v309
  %v311 = vsel %vm133, %v310, 0.0
  %v312 = vsub.f32 %v296, %v311
  %313 = vst [vmem:[%s5] sm:$0xc] %v312
  %v315 = vrot.slane %v296, 2
  %317 = vmatprep.subr.mxu0 0.0
  %318 = vmatpush1.msra.mxu0 %v113
  %319 = vmatprep.subr.mxu0 0.0
  %320 = vmatpush1.msra.mxu0 %v114
  %321 = vmatprep.subr.mxu0 0.0
  %322 = vmatpush1.msra.mxu0 %v115
  %323 = vmatprep.subr.mxu0 0.0
  %324 = vmatpush1.msra.mxu0 %v116
  %325 = vmatprep.subr.mxu0 0.0
  %326 = vmatpush1.msra.mxu0 %v117
  %327 = vmatprep.subr.mxu0 0.0
  %328 = vmatpush1.msra.mxu0 %v118
  %329 = vmatprep.subr.mxu0 0.0
  %330 = vmatpush1.msra.mxu0 %v119
  %331 = vmatprep.subr.mxu0 0.0
  %332 = vmatpush1.msra.mxu0 %v120
  %333 = vmatprep.subr.mxu0 0.0
  %334 = vmatpush1.msra.mxu0 %v121
  %335 = vmatprep.subr.mxu0 0.0
  %336 = vmatpush1.msra.mxu0 %v122
  %337 = vmatprep.subr.mxu0 0.0
  %338 = vmatpush1.msra.mxu0 %v123
  %339 = vmatprep.subr.mxu0 0.0
  %340 = vmatpush1.msra.mxu0 %v124
  %341 = vmatprep.subr.mxu0 0.0
  %342 = vmatpush1.msra.mxu0 %v125
  %343 = vmatprep.subr.mxu0 0.0
  %344 = vmatpush1.msra.mxu0 %v126
  %345 = vmatprep.subr.mxu0 0.0
  %346 = vmatpush1.msra.mxu0 %v127
  %347 = vmatprep.subr.mxu0 0.0
  %348 = vmatpush1.msra.mxu0 %v128
  %349 = vmatprep.subr.mxu0 0.0
  %350 = vmatpush1.msra.mxu0 0.0
  %351 = vmatprep.subr.mxu0 0.0
  %352 = vmatpush1.msra.mxu0 0.0
  %353 = vmatprep.subr.mxu0 0.0
  %354 = vmatpush1.msra.mxu0 0.0
  %355 = vmatprep.subr.mxu0 0.0
  %356 = vmatpush1.msra.mxu0 0.0
  %357 = vmatprep.subr.mxu0 0.0
  %358 = vmatpush1.msra.mxu0 0.0
  %359 = vmatprep.subr.mxu0 0.0
  %360 = vmatpush1.msra.mxu0 0.0
  %361 = vmatprep.subr.mxu0 0.0
  %362 = vmatpush1.msra.mxu0 0.0
  %363 = vmatprep.subr.mxu0 0.0
  %364 = vmatpush1.msra.mxu0 0.0
  %365 = vmatprep.subr.mxu0 0.0
  %366 = vmatpush1.msra.mxu0 0.0
  %367 = vmatprep.subr.mxu0 0.0
  %368 = vmatpush1.msra.mxu0 0.0
  %369 = vmatprep.subr.mxu0 0.0
  %370 = vmatpush1.msra.mxu0 0.0
  %371 = vmatprep.subr.mxu0 0.0
  %372 = vmatpush1.msra.mxu0 0.0
  %373 = vmatprep.subr.mxu0 0.0
  %374 = vmatpush1.msra.mxu0 0.0
  %375 = vmatprep.subr.mxu0 0.0
  %376 = vmatpush1.msra.mxu0 0.0
  %377 = vmatprep.subr.mxu0 0.0
  %378 = vmatpush1.msra.mxu0 0.0
  %379 = vmatprep.subr.mxu0 0.0
  %380 = vmatpush1.msra.mxu0 0.0
  %381 = vmatprep.mubr.f32.mxu0 0.0
  %382 = vmatmul.mubr.f32.gmra.mrb[0].mxu0 %v315
  %v383 = vpop.f32.mrb[0].mxu0
  %v384 = vadd.f32 0.0, %v383
  %v385 = vpop.f32.mrb[0].mxu0
  %386 = vdwg.mxu0
  %v388 = vrot.slane %v384, 4
  %v390 = vadd.f32 %v105, %v388
  %v391 = vsel %vm133, %v390, -inf
  %vm392 = vcmask 1045508
  %v393 = vsel %vm392, %v391, -inf
  %394 = vmax.xlane.f32.xlu0 %v393
  %v395 = vpop.xlane.xlu0 %394
  %v396 = vsub.f32 %v391, %v395
  %v397 = vmul.f32 %v396, 1.442695
  %v398 = vpow.pop %v397
  %v399 = vsel %vm392, %v398, 0.0
  %400 = vadd.xlane.f32.xlu0 %v399
  %v401 = vpop.xlane.xlu0 %400
  %v402 = vlog2.pop %v401
  %v403 = vmul.f32 %v402, 0.6931472
  %v404 = vadd.f32 %v395, %v403
  %v405 = vsel %vm133, %v404, 0.0
  %v406 = vsub.f32 %v390, %v405
  %407 = vst [vmem:[%s5] sm:$0x30] %v406
  %v409 = vrot.slane %v390, 4
  %411 = vmatprep.subr.mxu0 0.0
  %412 = vmatpush1.msra.mxu0 %v113
  %413 = vmatprep.subr.mxu0 0.0
  %414 = vmatpush1.msra.mxu0 %v114
  %415 = vmatprep.subr.mxu0 0.0
  %416 = vmatpush1.msra.mxu0 %v115
  %417 = vmatprep.subr.mxu0 0.0
  %418 = vmatpush1.msra.mxu0 %v116
  %419 = vmatprep.subr.mxu0 0.0
  %420 = vmatpush1.msra.mxu0 %v117
  %421 = vmatprep.subr.mxu0 0.0
  %422 = vmatpush1.msra.mxu0 %v118
  %423 = vmatprep.subr.mxu0 0.0
  %424 = vmatpush1.msra.mxu0 %v119
  %425 = vmatprep.subr.mxu0 0.0
  %426 = vmatpush1.msra.mxu0 %v120
  %427 = vmatprep.subr.mxu0 0.0
  %428 = vmatpush1.msra.mxu0 %v121
  %429 = vmatprep.subr.mxu0 0.0
  %430 = vmatpush1.msra.mxu0 %v122
  %431 = vmatprep.subr.mxu0 0.0
  %432 = vmatpush1.msra.mxu0 %v123
  %433 = vmatprep.subr.mxu0 0.0
  %434 = vmatpush1.msra.mxu0 %v124
  %435 = vmatprep.subr.mxu0 0.0
  %436 = vmatpush1.msra.mxu0 %v125
  %437 = vmatprep.subr.mxu0 0.0
  %438 = vmatpush1.msra.mxu0 %v126
  %439 = vmatprep.subr.mxu0 0.0
  %440 = vmatpush1.msra.mxu0 %v127
  %441 = vmatprep.subr.mxu0 0.0
  %442 = vmatpush1.msra.mxu0 %v128
  %443 = vmatprep.subr.mxu0 0.0
  %444 = vmatpush1.msra.mxu0 0.0
  %445 = vmatprep.subr.mxu0 0.0
  %446 = vmatpush1.msra.mxu0 0.0
  %447 = vmatprep.subr.mxu0 0.0
  %448 = vmatpush1.msra.mxu0 0.0
  %449 = vmatprep.subr.mxu0 0.0
  %450 = vmatpush1.msra.mxu0 0.0
  %451 = vmatprep.subr.mxu0 0.0
  %452 = vmatpush1.msra.mxu0 0.0
  %453 = vmatprep.subr.mxu0 0.0
  %454 = vmatpush1.msra.mxu0 0.0
  %455 = vmatprep.subr.mxu0 0.0
  %456 = vmatpush1.msra.mxu0 0.0
  %457 = vmatprep.subr.mxu0 0.0
  %458 = vmatpush1.msra.mxu0 0.0
  %459 = vmatprep.subr.mxu0 0.0
  %460 = vmatpush1.msra.mxu0 0.0
  %461 = vmatprep.subr.mxu0 0.0
  %462 = vmatpush1.msra.mxu0 0.0
  %463 = vmatprep.subr.mxu0 0.0
  %464 = vmatpush1.msra.mxu0 0.0
  %465 = vmatprep.subr.mxu0 0.0
  %466 = vmatpush1.msra.mxu0 0.0
  %467 = vmatprep.subr.mxu0 0.0
  %468 = vmatpush1.msra.mxu0 0.0
  %469 = vmatprep.subr.mxu0 0.0
  %470 = vmatpush1.msra.mxu0 0.0
  %471 = vmatprep.subr.mxu0 0.0
  %472 = vmatpush1.msra.mxu0 0.0
  %473 = vmatprep.subr.mxu0 0.0
  %474 = vmatpush1.msra.mxu0 0.0
  %475 = vmatprep.mubr.f32.mxu0 0.0
  %476 = vmatmul.mubr.f32.gmra.mrb[0].mxu0 %v409
  %v477 = vpop.f32.mrb[0].mxu0
  %v478 = vadd.f32 0.0, %v477
  %v479 = vpop.f32.mrb[0].mxu0
  %480 = vdwg.mxu0
  %v482 = vrot.slane %v478, 2
  %v484 = vadd.f32 %v105, %v482
  %v485 = vsel %vm133, %v484, -inf
  %vm486 = vcmask 1047558
  %v487 = vsel %vm486, %v485, -inf
  %488 = vmax.xlane.f32.xlu0 %v487
  %v489 = vpop.xlane.xlu0 %488
  %v490 = vsub.f32 %v485, %v489
  %v491 = vmul.f32 %v490, 1.442695
  %v492 = vpow.pop %v491
  %v493 = vsel %vm486, %v492, 0.0
  %494 = vadd.xlane.f32.xlu0 %v493
  %v495 = vpop.xlane.xlu0 %494
  %v496 = vlog2.pop %v495
  %v497 = vmul.f32 %v496, 0.6931472
  %v498 = vadd.f32 %v489, %v497
  %v499 = vsel %vm133, %v498, 0.0
  %v500 = vsub.f32 %v484, %v499
  %501 = vst [vmem:[%s5] sm:$0xc0] %v500
  %v503 = vrot.slane %v484, 6
  %505 = vmatprep.subr.mxu0 0.0
  %506 = vmatpush1.msra.mxu0 %v113
  %507 = vmatprep.subr.mxu0 0.0
  %508 = vmatpush1.msra.mxu0 %v114
  %509 = vmatprep.subr.mxu0 0.0
  %510 = vmatpush1.msra.mxu0 %v115
  %511 = vmatprep.subr.mxu0 0.0
  %512 = vmatpush1.msra.mxu0 %v116
  %513 = vmatprep.subr.mxu0 0.0
  %514 = vmatpush1.msra.mxu0 %v117
  %515 = vmatprep.subr.mxu0 0.0
  %516 = vmatpush1.msra.mxu0 %v118
  %517 = vmatprep.subr.mxu0 0.0
  %518 = vmatpush1.msra.mxu0 %v119
  %519 = vmatprep.subr.mxu0 0.0
  %520 = vmatpush1.msra.mxu0 %v120
  %521 = vmatprep.subr.mxu0 0.0
  %522 = vmatpush1.msra.mxu0 %v121
  %523 = vmatprep.subr.mxu0 0.0
  %524 = vmatpush1.msra.mxu0 %v122
  %525 = vmatprep.subr.mxu0 0.0
  %526 = vmatpush1.msra.mxu0 %v123
  %527 = vmatprep.subr.mxu0 0.0
  %528 = vmatpush1.msra.mxu0 %v124
  %529 = vmatprep.subr.mxu0 0.0
  %530 = vmatpush1.msra.mxu0 %v125
  %531 = vmatprep.subr.mxu0 0.0
  %532 = vmatpush1.msra.mxu0 %v126
  %533 = vmatprep.subr.mxu0 0.0
  %534 = vmatpush1.msra.mxu0 %v127
  %535 = vmatprep.subr.mxu0 0.0
  %536 = vmatpush1.msra.mxu0 %v128
  %537 = vmatprep.subr.mxu0 0.0
  %538 = vmatpush1.msra.mxu0 0.0
  %539 = vmatprep.subr.mxu0 0.0
  %540 = vmatpush1.msra.mxu0 0.0
  %541 = vmatprep.subr.mxu0 0.0
  %542 = vmatpush1.msra.mxu0 0.0
  %543 = vmatprep.subr.mxu0 0.0
  %544 = vmatpush1.msra.mxu0 0.0
  %545 = vmatprep.subr.mxu0 0.0
  %546 = vmatpush1.msra.mxu0 0.0
  %547 = vmatprep.subr.mxu0 0.0
  %548 = vmatpush1.msra.mxu0 0.0
  %549 = vmatprep.subr.mxu0 0.0
  %550 = vmatpush1.msra.mxu0 0.0
  %551 = vmatprep.subr.mxu0 0.0
  %552 = vmatpush1.msra.mxu0 0.0
  %553 = vmatprep.subr.mxu0 0.0
  %554 = vmatpush1.msra.mxu0 0.0
  %555 = vmatprep.subr.mxu0 0.0
  %556 = vmatpush1.msra.mxu0 0.0
  %557 = vmatprep.subr.mxu0 0.0
  %558 = vmatpush1.msra.mxu0 0.0
  %559 = vmatprep.subr.mxu0 0.0
  %560 = vmatpush1.msra.mxu0 0.0
  %561 = vmatprep.subr.mxu0 0.0
  %562 = vmatpush1.msra.mxu0 0.0
  %563 = vmatprep.subr.mxu0 0.0
  %564 = vmatpush1.msra.mxu0 0.0
  %565 = vmatprep.subr.mxu0 0.0
  %566 = vmatpush1.msra.mxu0 0.0
  %567 = vmatprep.subr.mxu0 0.0
  %568 = vmatpush1.msra.mxu0 0.0
  %569 = vmatprep.mubr.f32.mxu0 0.0
  %570 = vmatmul.mubr.f32.gmra.mrb[0].mxu0 %v503
  %v571 = vpop.f32.mrb[0].mxu0
  %v572 = vadd.f32 0.0, %v571
  %v573 = vpop.f32.mrb[0].mxu0
  %574 = vdwg.mxu0
  %v575 = vadd.f32 %v110, %v572
  %v576 = vsel %vm133, %v575, -inf
  %v577 = vsel %vm207, %v576, -inf
  %578 = vmax.xlane.f32.xlu0 %v577
  %v579 = vpop.xlane.xlu0 %578
  %v580 = vsub.f32 %v576, %v579
  %v581 = vmul.f32 %v580, 1.442695
  %v582 = vpow.pop %v581
  %v583 = vsel %vm207, %v582, 0.0
  %584 = vadd.xlane.f32.xlu0 %v583
  %v585 = vpop.xlane.xlu0 %584
  %v586 = vlog2.pop %v585
  %v587 = vmul.f32 %v586, 0.6931472
  %v588 = vadd.f32 %v579, %v587
  %v589 = vsel %vm133, %v588, 0.0
  %v590 = vsub.f32 %v575, %v589
  %591 = vst [vmem:[%s5 + $0x8] sm:$0x3] %v590
  %592 = vmatprep.subr.mxu0 0.0
  %593 = vmatpush1.msra.mxu0 %v113
  %594 = vmatprep.subr.mxu0 0.0
  %595 = vmatpush1.msra.mxu0 %v114
  %596 = vmatprep.subr.mxu0 0.0
  %597 = vmatpush1.msra.mxu0 %v115
  %598 = vmatprep.subr.mxu0 0.0
  %599 = vmatpush1.msra.mxu0 %v116
  %600 = vmatprep.subr.mxu0 0.0
  %601 = vmatpush1.msra.mxu0 %v117
  %602 = vmatprep.subr.mxu0 0.0
  %603 = vmatpush1.msra.mxu0 %v118
  %604 = vmatprep.subr.mxu0 0.0
  %605 = vmatpush1.msra.mxu0 %v119
  %606 = vmatprep.subr.mxu0 0.0
  %607 = vmatpush1.msra.mxu0 %v120
  %608 = vmatprep.subr.mxu0 0.0
  %609 = vmatpush1.msra.mxu0 %v121
  %610 = vmatprep.subr.mxu0 0.0
  %611 = vmatpush1.msra.mxu0 %v122
  %612 = vmatprep.subr.mxu0 0.0
  %613 = vmatpush1.msra.mxu0 %v123
  %614 = vmatprep.subr.mxu0 0.0
  %615 = vmatpush1.msra.mxu0 %v124
  %616 = vmatprep.subr.mxu0 0.0
  %617 = vmatpush1.msra.mxu0 %v125
  %618 = vmatprep.subr.mxu0 0.0
  %619 = vmatpush1.msra.mxu0 %v126
  %620 = vmatprep.subr.mxu0 0.0
  %621 = vmatpush1.msra.mxu0 %v127
  %622 = vmatprep.subr.mxu0 0.0
  %623 = vmatpush1.msra.mxu0 %v128
  %624 = vmatprep.subr.mxu0 0.0
  %625 = vmatpush1.msra.mxu0 0.0
  %626 = vmatprep.subr.mxu0 0.0
  %627 = vmatpush1.msra.mxu0 0.0
  %628 = vmatprep.subr.mxu0 0.0
  %629 = vmatpush1.msra.mxu0 0.0
  %630 = vmatprep.subr.mxu0 0.0
  %631 = vmatpush1.msra.mxu0 0.0
  %632 = vmatprep.subr.mxu0 0.0
  %633 = vmatpush1.msra.mxu0 0.0
  %634 = vmatprep.subr.mxu0 0.0
  %635 = vmatpush1.msra.mxu0 0.0
  %636 = vmatprep.subr.mxu0 0.0
  %637 = vmatpush1.msra.mxu0 0.0
  %638 = vmatprep.subr.mxu0 0.0
  %639 = vmatpush1.msra.mxu0 0.0
  %640 = vmatprep.subr.mxu0 0.0
  %641 = vmatpush1.msra.mxu0 0.0
  %642 = vmatprep.subr.mxu0 0.0
  %643 = vmatpush1.msra.mxu0 0.0
  %644 = vmatprep.subr.mxu0 0.0
  %645 = vmatpush1.msra.mxu0 0.0
  %646 = vmatprep.subr.mxu0 0.0
  %647 = vmatpush1.msra.mxu0 0.0
  %648 = vmatprep.subr.mxu0 0.0
  %649 = vmatpush1.msra.mxu0 0.0
  %650 = vmatprep.subr.mxu0 0.0
  %651 = vmatpush1.msra.mxu0 0.0
  %652 = vmatprep.subr.mxu0 0.0
  %653 = vmatpush1.msra.mxu0 0.0
  %654 = vmatprep.subr.mxu0 0.0
  %655 = vmatpush1.msra.mxu0 0.0
  %656 = vmatprep.mubr.f32.mxu0 0.0
  %657 = vmatmul.mubr.f32.gmra.mrb[0].mxu0 %v575
  %v658 = vpop.f32.mrb[0].mxu0
  %v659 = vadd.f32 0.0, %v658
  %v660 = vpop.f32.mrb[0].mxu0
  %661 = vdwg.mxu0
  %v663 = vrot.slane %v659, 6
  %v665 = vadd.f32 %v110, %v663
  %v666 = vsel %vm133, %v665, -inf
  %v667 = vsel %vm298, %v666, -inf
  %668 = vmax.xlane.f32.xlu0 %v667
  %v669 = vpop.xlane.xlu0 %668
  %v670 = vsub.f32 %v666, %v669
  %v671 = vmul.f32 %v670, 1.442695
  %v672 = vpow.pop %v671
  %v673 = vsel %vm298, %v672, 0.0
  %674 = vadd.xlane.f32.xlu0 %v673
  %v675 = vpop.xlane.xlu0 %674
  %v676 = vlog2.pop %v675
  %v677 = vmul.f32 %v676, 0.6931472
  %v678 = vadd.f32 %v669, %v677
  %v679 = vsel %vm133, %v678, 0.0
  %v680 = vsub.f32 %v665, %v679
  %681 = vst [vmem:[%s5 + $0x8] sm:$0xc] %v680
  %v683 = vrot.slane %v665, 2
  %685 = vmatprep.subr.mxu0 0.0
  %686 = vmatpush1.msra.mxu0 %v113
  %687 = vmatprep.subr.mxu0 0.0
  %688 = vmatpush1.msra.mxu0 %v114
  %689 = vmatprep.subr.mxu0 0.0
  %690 = vmatpush1.msra.mxu0 %v115
  %691 = vmatprep.subr.mxu0 0.0
  %692 = vmatpush1.msra.mxu0 %v116
  %693 = vmatprep.subr.mxu0 0.0
  %694 = vmatpush1.msra.mxu0 %v117
  %695 = vmatprep.subr.mxu0 0.0
  %696 = vmatpush1.msra.mxu0 %v118
  %697 = vmatprep.subr.mxu0 0.0
  %698 = vmatpush1.msra.mxu0 %v119
  %699 = vmatprep.subr.mxu0 0.0
  %700 = vmatpush1.msra.mxu0 %v120
  %701 = vmatprep.subr.mxu0 0.0
  %702 = vmatpush1.msra.mxu0 %v121
  %703 = vmatprep.subr.mxu0 0.0
  %704 = vmatpush1.msra.mxu0 %v122
  %705 = vmatprep.subr.mxu0 0.0
  %706 = vmatpush1.msra.mxu0 %v123
  %707 = vmatprep.subr.mxu0 0.0
  %708 = vmatpush1.msra.mxu0 %v124
  %709 = vmatprep.subr.mxu0 0.0
  %710 = vmatpush1.msra.mxu0 %v125
  %711 = vmatprep.subr.mxu0 0.0
  %712 = vmatpush1.msra.mxu0 %v126
  %713 = vmatprep.subr.mxu0 0.0
  %714 = vmatpush1.msra.mxu0 %v127
  %715 = vmatprep.subr.mxu0 0.0
  %716 = vmatpush1.msra.mxu0 %v128
  %717 = vmatprep.subr.mxu0 0.0
  %718 = vmatpush1.msra.mxu0 0.0
  %719 = vmatprep.subr.mxu0 0.0
  %720 = vmatpush1.msra.mxu0 0.0
  %721 = vmatprep.subr.mxu0 0.0
  %722 = vmatpush1.msra.mxu0 0.0
  %723 = vmatprep.subr.mxu0 0.0
  %724 = vmatpush1.msra.mxu0 0.0
  %725 = vmatprep.subr.mxu0 0.0
  %726 = vmatpush1.msra.mxu0 0.0
  %727 = vmatprep.subr.mxu0 0.0
  %728 = vmatpush1.msra.mxu0 0.0
  %729 = vmatprep.subr.mxu0 0.0
  %730 = vmatpush1.msra.mxu0 0.0
  %731 = vmatprep.subr.mxu0 0.0
  %732 = vmatpush1.msra.mxu0 0.0
  %733 = vmatprep.subr.mxu0 0.0
  %734 = vmatpush1.msra.mxu0 0.0
  %735 = vmatprep.subr.mxu0 0.0
  %736 = vmatpush1.msra.mxu0 0.0
  %737 = vmatprep.subr.mxu0 0.0
  %738 = vmatpush1.msra.mxu0 0.0
  %739 = vmatprep.subr.mxu0 0.0
  %740 = vmatpush1.msra.mxu0 0.0
  %741 = vmatprep.subr.mxu0 0.0
  %742 = vmatpush1.msra.mxu0 0.0
  %743 = vmatprep.subr.mxu0 0.0
  %744 = vmatpush1.msra.mxu0 0.0
  %745 = vmatprep.subr.mxu0 0.0
  %746 = vmatpush1.msra.mxu0 0.0
  %747 = vmatprep.subr.mxu0 0.0
  %748 = vmatpush1.msra.mxu0 0.0
  %749 = vmatprep.mubr.f32.mxu0 0.0
  %750 = vmatmul.mubr.f32.gmra.mrb[0].mxu0 %v683
  %v751 = vpop.f32.mrb[0].mxu0
  %v752 = vadd.f32 0.0, %v751
  %v753 = vpop.f32.mrb[0].mxu0
  %754 = vdwg.mxu0
  %v756 = vrot.slane %v752, 4
  %v758 = vadd.f32 %v110, %v756
  %v759 = vsel %vm133, %v758, -inf
  %v760 = vsel %vm392, %v759, -inf
  %761 = vmax.xlane.f32.xlu0 %v760
  %v762 = vpop.xlane.xlu0 %761
  %v763 = vsub.f32 %v759, %v762
  %v764 = vmul.f32 %v763, 1.442695
  %v765 = vpow.pop %v764
  %v766 = vsel %vm392, %v765, 0.0
  %767 = vadd.xlane.f32.xlu0 %v766
  %v768 = vpop.xlane.xlu0 %767
  %v769 = vlog2.pop %v768
  %v770 = vmul.f32 %v769, 0.6931472
  %v771 = vadd.f32 %v762, %v770
  %v772 = vsel %vm133, %v771, 0.0
  %v773 = vsub.f32 %v758, %v772
  %774 = vst [vmem:[%s5 + $0x8] sm:$0x30] %v773
  %v776 = vrot.slane %v758, 4
  %778 = vmatprep.subr.mxu0 0.0
  %779 = vmatpush1.msra.mxu0 %v113
  %780 = vmatprep.subr.mxu0 0.0
  %781 = vmatpush1.msra.mxu0 %v114
  %782 = vmatprep.subr.mxu0 0.0
  %783 = vmatpush1.msra.mxu0 %v115
  %784 = vmatprep.subr.mxu0 0.0
  %785 = vmatpush1.msra.mxu0 %v116
  %786 = vmatprep.subr.mxu0 0.0
  %787 = vmatpush1.msra.mxu0 %v117
  %788 = vmatprep.subr.mxu0 0.0
  %789 = vmatpush1.msra.mxu0 %v118
  %790 = vmatprep.subr.mxu0 0.0
  %791 = vmatpush1.msra.mxu0 %v119
  %792 = vmatprep.subr.mxu0 0.0
  %793 = vmatpush1.msra.mxu0 %v120
  %794 = vmatprep.subr.mxu0 0.0
  %795 = vmatpush1.msra.mxu0 %v121
  %796 = vmatprep.subr.mxu0 0.0
  %797 = vmatpush1.msra.mxu0 %v122
  %798 = vmatprep.subr.mxu0 0.0
  %799 = vmatpush1.msra.mxu0 %v123
  %800 = vmatprep.subr.mxu0 0.0
  %801 = vmatpush1.msra.mxu0 %v124
  %802 = vmatprep.subr.mxu0 0.0
  %803 = vmatpush1.msra.mxu0 %v125
  %804 = vmatprep.subr.mxu0 0.0
  %805 = vmatpush1.msra.mxu0 %v126
  %806 = vmatprep.subr.mxu0 0.0
  %807 = vmatpush1.msra.mxu0 %v127
  %808 = vmatprep.subr.mxu0 0.0
  %809 = vmatpush1.msra.mxu0 %v128
  %810 = vmatprep.subr.mxu0 0.0
  %811 = vmatpush1.msra.mxu0 0.0
  %812 = vmatprep.subr.mxu0 0.0
  %813 = vmatpush1.msra.mxu0 0.0
  %814 = vmatprep.subr.mxu0 0.0
  %815 = vmatpush1.msra.mxu0 0.0
  %816 = vmatprep.subr.mxu0 0.0
  %817 = vmatpush1.msra.mxu0 0.0
  %818 = vmatprep.subr.mxu0 0.0
  %819 = vmatpush1.msra.mxu0 0.0
  %820 = vmatprep.subr.mxu0 0.0
  %821 = vmatpush1.msra.mxu0 0.0
  %822 = vmatprep.subr.mxu0 0.0
  %823 = vmatpush1.msra.mxu0 0.0
  %824 = vmatprep.subr.mxu0 0.0
  %825 = vmatpush1.msra.mxu0 0.0
  %826 = vmatprep.subr.mxu0 0.0
  %827 = vmatpush1.msra.mxu0 0.0
  %828 = vmatprep.subr.mxu0 0.0
  %829 = vmatpush1.msra.mxu0 0.0
  %830 = vmatprep.subr.mxu0 0.0
  %831 = vmatpush1.msra.mxu0 0.0
  %832 = vmatprep.subr.mxu0 0.0
  %833 = vmatpush1.msra.mxu0 0.0
  %834 = vmatprep.subr.mxu0 0.0
  %835 = vmatpush1.msra.mxu0 0.0
  %836 = vmatprep.subr.mxu0 0.0
  %837 = vmatpush1.msra.mxu0 0.0
  %838 = vmatprep.subr.mxu0 0.0
  %839 = vmatpush1.msra.mxu0 0.0
  %840 = vmatprep.subr.mxu0 0.0
  %841 = vmatpush1.msra.mxu0 0.0
  %842 = vmatprep.mubr.f32.mxu0 0.0
  %843 = vmatmul.mubr.f32.gmra.mrb[0].mxu0 %v776
  %v844 = vpop.f32.mrb[0].mxu0
  %v845 = vadd.f32 0.0, %v844
  %v846 = vpop.f32.mrb[0].mxu0
  %847 = vdwg.mxu0
  %v849 = vrot.slane %v845, 2
  %v851 = vadd.f32 %v110, %v849
  %v852 = vsel %vm133, %v851, -inf
  %v853 = vsel %vm486, %v852, -inf
  %854 = vmax.xlane.f32.xlu0 %v853
  %v855 = vpop.xlane.xlu0 %854
  %v856 = vsub.f32 %v852, %v855
  %v857 = vmul.f32 %v856, 1.442695
  %v858 = vpow.pop %v857
  %v859 = vsel %vm486, %v858, 0.0
  %860 = vadd.xlane.f32.xlu0 %v859
  %v861 = vpop.xlane.xlu0 %860
  %v862 = vlog2.pop %v861
  %v863 = vmul.f32 %v862, 0.6931472
  %v864 = vadd.f32 %v855, %v863
  %v865 = vsel %vm133, %v864, 0.0
  %v866 = vsub.f32 %v851, %v865
  %867 = vst [vmem:[%s5 + $0x8] sm:$0xc0] %v866
  // Predicated region
  $region22: #{_rnn_forward_sequence_impl.1} parent=0 // pred_check
    _
  $region23: #{_rnn_forward_sequence_impl.1} parent=0 // pred_check_branch
    %869 = sbr.rel (0) target = $region25
  $region24: #{_rnn_forward_sequence_impl.1} parent=0 // pred_region
    _
  $region25: #{_rnn_forward_sequence_impl.1} parent=0 // pred_fallthru
    _
  // Predicated region
  $region26: #{_rnn_forward_sequence_impl.1} parent=0 // pred_check
    _
  $region27: #{_rnn_forward_sequence_impl.1} parent=0 // pred_check_branch
    %871 = sbr.rel (0) target = $region29
  $region28: #{_rnn_forward_sequence_impl.1} parent=0 // pred_region
    _
  $region29: #{_rnn_forward_sequence_impl.1} parent=0 // pred_fallthru
    _

</llo_original>
